<compile_context>
chip_gen: v7x
topology: tpu7x:2x2x1
jax: 0.10.0
libtpu: 0.0.40
codegen_flags: <defaults>
</compile_context>

<pallas_src>
import math

import jax
import jax.numpy as jnp
from jax.experimental import pallas as pl
from jax.experimental.pallas import tpu as pltpu

_TILE_BYTE_BUDGET = 6 * 1024 * 1024   # per grid step: input + output tile, layout-padded
_MIN_TILE_BYTES = 256 * 1024          # don't shrink tiles below this just to add grid steps
_MIN_GRID_STEPS = 4                   # >= 2 steps per TensorCore on v7x, enables pipelining


def _round_up(v, m):
    return -(-v // m) * m


def _sublane_multiple(itemsize):
    # f32 -> 8, bf16 -> 16, int8/fp8 -> 32 (sub-32-bit dtypes pack along sublanes).
    return max(8, 32 // itemsize)


def _tile_vmem_bytes(shape, itemsize):
    """Layout-padded VMEM footprint of a block (lanes -> x128, sublanes -> dtype mult)."""
    if len(shape) == 1:
        return _round_up(shape[0] * itemsize, 512)
    sub = _sublane_multiple(itemsize)
    lanes = _round_up(shape[-1], 128)
    subl = _round_up(shape[-2], sub)
    lead = math.prod(shape[:-2]) if len(shape) > 2 else 1
    return lead * subl * lanes * itemsize


def _physical_vmem_bytes():
    try:
        info = pltpu.get_tpu_info()
        v = getattr(info, "vmem_capacity_bytes", None)
        if v:
            return int(v)
    except Exception:
        pass
    return 64 * 1024 * 1024  # conservative: v7x per-TensorCore VMEM


def _compiler_params(in_tile_bytes, out_tile_bytes):
    # Double-buffered input + output tiles plus headroom for internal scratch.
    needed = 2 * (in_tile_bytes + out_tile_bytes) + (4 << 20)
    cap = (_physical_vmem_bytes() * 3) // 4
    limit = int(min(max(needed, 32 << 20), cap))
    return pltpu.CompilerParams(dimension_semantics=("parallel",),
                                vmem_limit_bytes=limit)


def _choose_batch_tile(B, row_bytes, sub):
    """Batch rows per grid step for a ragged pl.cdiv grid.

    row_bytes: layout-padded (input + output) VMEM bytes per batch row.
    sub: required multiple of tb when tb < B (sublane constraint); 1 if none.
    Returns None when not even `sub` rows fit the budget.
    """
    row_bytes = max(row_bytes, 1)
    budget_rows = _TILE_BYTE_BUDGET // row_bytes
    if budget_rows < 1:
        return None if sub > 1 else 1
    min_rows = max(1, _MIN_TILE_BYTES // row_bytes)
    grid_rows = -(-B // _MIN_GRID_STEPS)          # ceil(B / _MIN_GRID_STEPS)
    tb = min(budget_rows, max(grid_rows, min_rows))
    tb = min(tb, B)
    if sub > 1 and tb < B:
        if budget_rows < sub:
            return None
        tb = max(sub, (tb // sub) * sub)
    return max(tb, 1)


def make_pad(pad):
    """Returns a callable implementing F.pad(x, pad) (constant 0) over the last 1-2 dims."""
    pad = tuple(pad)
    if len(pad) == 2:
        pad = (pad[0], pad[1], 0, 0)
    assert len(pad) == 4, "only padding over the last two dims is supported"
    wl, wr, ht, hb = pad
    # TODO(synk): negative padding (cropping) and reflect/replicate F.pad modes are not
    # implemented (module spec uses the default constant-0 mode).
    assert min(pad) >= 0, "negative padding not supported in this kernel"

    def pad_fn(x):
        if wl == 0 and wr == 0 and ht == 0 and hb == 0:
            return x

        added_dim = False
        if x.ndim == 1:
            assert ht == 0 and hb == 0, "length-4 pad needs rank >= 2"
            x = x[None, :]
            added_dim = True
        assert x.ndim >= 2, "need at least 2 dims (..., H, W)"

        *lead, H, W = x.shape
        Ho, Wo = H + ht + hb, W + wl + wr
        B = math.prod(lead) if lead else 1
        itemsize = jnp.dtype(x.dtype).itemsize
        sub = _sublane_multiple(itemsize)
        out = None

        # ---- Lane-dense fast path: only H padded -> flatten (H, W) so the output
        #      last dim is Ho*W wide (unmasked lane-dense stores, dense VMEM). ----
        if wl == 0 and wr == 0:
            in_row = _tile_vmem_bytes((sub, H * W), itemsize) // sub
            out_row = _tile_vmem_bytes((sub, Ho * W), itemsize) // sub
            tb = _choose_batch_tile(B, in_row + out_row, sub)
            if tb is not None:

                def row_kernel(x_ref, o_ref):
                    dt = o_ref.dtype
                    n = o_ref.shape[0]
                    if ht:
                        o_ref[:, 0:ht * W] = jnp.zeros((n, ht * W), dt)
                    if hb:
                        o_ref[:, (ht + H) * W:Ho * W] = jnp.zeros((n, hb * W), dt)
                    o_ref[:, ht * W:(ht + H) * W] = x_ref[...]

                out = pl.pallas_call(
                    row_kernel,
                    out_shape=jax.ShapeDtypeStruct((B, Ho * W), x.dtype),
                    grid=(pl.cdiv(B, tb),),
                    in_specs=[pl.BlockSpec((tb, H * W), lambda i: (i, 0))],
                    out_specs=pl.BlockSpec((tb, Ho * W), lambda i: (i, 0)),
                    compiler_params=_compiler_params(
                        _tile_vmem_bytes((tb, H * W), itemsize),
                        _tile_vmem_bytes((tb, Ho * W), itemsize)),
                )(x.reshape(B, H * W))
                out = out.reshape(*lead, Ho, W)

        if out is None:
            # ---- General path: pad the last two dims of (tb, H, W) blocks. ----
            in_row = _tile_vmem_bytes((1, H, W), itemsize)
            out_row = _tile_vmem_bytes((1, Ho, Wo), itemsize)
            tb = _choose_batch_tile(B, in_row + out_row, 1)
            if tb is None:
                tb = 1
            # TODO(synk): if even a single (1,H,W)+(1,Ho,Wo) slab exceeds the budget,
            # an H-strip grid axis would restore MiB-scale pipelining; we only raise
            # vmem_limit_bytes here.

            def hw_kernel(x_ref, o_ref):
                dt = o_ref.dtype
                n = o_ref.shape[0]
                # H halos: full lane-width (Wo) stores at a sublane offset -> unmasked.
                if ht:
                    o_ref[:, 0:ht, :] = jnp.zeros((n, ht, Wo), dt)
                if hb:
                    o_ref[:, ht + H:Ho, :] = jnp.zeros((n, hb, Wo), dt)
                xv = x_ref[...]
                if wl or wr:
                    # Compose W padding in registers (XLU/VPU slots are idle) so the
                    # interior write is one full-width lane-aligned store instead of
                    # narrow masked strips + a lane-offset store.
                    parts = []
                    if wl:
                        parts.append(jnp.zeros((n, H, wl), dt))
                    parts.append(xv)
                    if wr:
                        parts.append(jnp.zeros((n, H, wr), dt))
                    xv = jnp.concatenate(parts, axis=-1)
                o_ref[:, ht:ht + H, :] = xv

            out = pl.pallas_call(
                hw_kernel,
                out_shape=jax.ShapeDtypeStruct((B, Ho, Wo), x.dtype),
                grid=(pl.cdiv(B, tb),),
                in_specs=[pl.BlockSpec((tb, H, W), lambda i: (i, 0, 0))],
                out_specs=pl.BlockSpec((tb, Ho, Wo), lambda i: (i, 0, 0)),
                compiler_params=_compiler_params(
                    _tile_vmem_bytes((tb, H, W), itemsize),
                    _tile_vmem_bytes((tb, Ho, Wo), itemsize)),
            )(x.reshape(B, H, W))
            out = out.reshape(*lead, Ho, Wo)

        if added_dim:
            out = out[0]
        return out

    return pad_fn


if __name__ == "__main__":
    key = jax.random.PRNGKey(0)
    k0, k1, k2 = jax.random.split(key, 3)
    x = jax.random.normal(k0, (2, 4, 16, 16), dtype=jnp.float32)

    # General path: pad both H and W (PyTorch order: w_left, w_right, h_top, h_bottom).
    pad = (1, 2, 3, 4)
    out = jax.block_until_ready(make_pad(pad)(x))
    ref = jnp.pad(x, ((0, 0), (0, 0), (pad[2], pad[3]), (pad[0], pad[1])))
    assert out.shape == ref.shape, (out.shape, ref.shape)
    assert jnp.array_equal(out, ref), "mismatch vs reference pad (H+W)"

    # Lane-dense fast path: H-only padding.
    pad_h = (0, 0, 3, 4)
    out_h = jax.block_until_ready(make_pad(pad_h)(x))
    ref_h = jnp.pad(x, ((0, 0), (0, 0), (pad_h[2], pad_h[3]), (0, 0)))
    assert out_h.shape == ref_h.shape, (out_h.shape, ref_h.shape)
    assert jnp.array_equal(out_h, ref_h), "mismatch vs reference pad (H only)"

    # W-only padding via a length-2 pad tuple (last-dim only, PyTorch semantics).
    pad_w = (1, 2)
    out_w = jax.block_until_ready(make_pad(pad_w)(x))
    ref_w = jnp.pad(x, ((0, 0), (0, 0), (0, 0), (pad_w[0], pad_w[1])))
    assert out_w.shape == ref_w.shape, (out_w.shape, ref_w.shape)
    assert jnp.array_equal(out_w, ref_w), "mismatch vs reference pad (W only)"

    # Ragged-grid general path: batch (3*7=21) not divisible by the chosen tile.
    x2 = jax.random.normal(k1, (3, 7, 40, 40), dtype=jnp.float32)
    out2 = jax.block_until_ready(make_pad(pad)(x2))
    ref2 = jnp.pad(x2, ((0, 0), (0, 0), (pad[2], pad[3]), (pad[0], pad[1])))
    assert out2.shape == ref2.shape, (out2.shape, ref2.shape)
    assert jnp.array_equal(out2, ref2), "mismatch vs reference pad (ragged H+W)"

    # Ragged-grid, dtype-aware fast path: bf16, H-only padding, B=30 (not mult of 16).
    x3 = jax.random.normal(k2, (30, 64, 64), dtype=jnp.float32).astype(jnp.bfloat16)
    pad_h3 = (0, 0, 2, 1)
    out3 = jax.block_until_ready(make_pad(pad_h3)(x3))
    ref3 = jnp.pad(x3, ((0, 0), (pad_h3[2], pad_h3[3]), (0, 0)))
    assert out3.shape == ref3.shape, (out3.shape, ref3.shape)
    assert jnp.array_equal(out3, ref3), "mismatch vs reference pad (bf16 ragged H only)"

    print("KERNEL_OK")
</pallas_src>

<mosaic_0001>
module attributes {stable_mosaic.version = 11 : i64} {
  func.func @hw_kernel(%arg0: i32, %arg1: memref<8x16x16xf32, #tpu.memory_space<vmem>>, %arg2: memref<8x23x19xf32, #tpu.memory_space<vmem>>) attributes {dimension_semantics = [#tpu.dimension_semantics<parallel>], iteration_bounds = array<i64: 1>, scalar_prefetch = 0 : i64, scratch_operands = 0 : i64, tpu.core_type = #tpu.core_type<tc>, window_params = [{transform_indices = @transform_0, window_bounds = array<i64: 8, 16, 16>}, {transform_indices = @transform_1, window_bounds = array<i64: 8, 23, 19>}]} {
    %cst = arith.constant 0.000000e+00 : f32
    %0 = vector.broadcast %cst : f32 to vector<8x3x19xf32>
    %c0 = arith.constant 0 : index
    %c0_0 = arith.constant 0 : index
    %c0_1 = arith.constant 0 : index
    %1 = vector.load %arg2[%c0, %c0_0, %c0_1] : memref<8x23x19xf32, #tpu.memory_space<vmem>>, vector<8x3x19xf32>
    tpu.vector_store %arg2[%c0, %c0_0, %c0_1], %0 {strides = array<i32>} : memref<8x23x19xf32, #tpu.memory_space<vmem>>, vector<8x3x19xf32>,
    %cst_2 = arith.constant 0.000000e+00 : f32
    %2 = vector.broadcast %cst_2 : f32 to vector<8x4x19xf32>
    %c0_3 = arith.constant 0 : index
    %c19 = arith.constant 19 : index
    %c0_4 = arith.constant 0 : index
    %3 = vector.load %arg2[%c0_3, %c19, %c0_4] : memref<8x23x19xf32, #tpu.memory_space<vmem>>, vector<8x4x19xf32>
    tpu.vector_store %arg2[%c0_3, %c19, %c0_4], %2 {strides = array<i32>} : memref<8x23x19xf32, #tpu.memory_space<vmem>>, vector<8x4x19xf32>,
    %c0_5 = arith.constant 0 : index
    %c0_6 = arith.constant 0 : index
    %c0_7 = arith.constant 0 : index
    %4 = vector.load %arg1[%c0_5, %c0_6, %c0_7] : memref<8x16x16xf32, #tpu.memory_space<vmem>>, vector<8x16x16xf32>
    %cst_8 = arith.constant 0.000000e+00 : f32
    %5 = vector.broadcast %cst_8 : f32 to vector<8x16x1xf32>
    %cst_9 = arith.constant 0.000000e+00 : f32
    %6 = vector.broadcast %cst_9 : f32 to vector<8x16x2xf32>
    %7 = tpu.concatenate %5, %4, %6 in 2 : vector<8x16x1xf32>, vector<8x16x16xf32>, vector<8x16x2xf32> -> vector<8x16x19xf32>
    %c0_10 = arith.constant 0 : index
    %c3 = arith.constant 3 : index
    %c0_11 = arith.constant 0 : index
    %8 = vector.load %arg2[%c0_10, %c3, %c0_11] : memref<8x23x19xf32, #tpu.memory_space<vmem>>, vector<8x16x19xf32>
    tpu.vector_store %arg2[%c0_10, %c3, %c0_11], %7 {strides = array<i32>} : memref<8x23x19xf32, #tpu.memory_space<vmem>>, vector<8x16x19xf32>,
    return
  }
  func.func @transform_0(%arg0: i32) -> (i32, i32, i32) {
    %c0_i32 = arith.constant 0 : i32
    %c0_i32_0 = arith.constant 0 : i32
    %c0_i32_1 = arith.constant 0 : i32
    return %arg0, %c0_i32, %c0_i32_0 : i32, i32, i32
  }
  func.func @transform_1(%arg0: i32) -> (i32, i32, i32) {
    %c0_i32 = arith.constant 0 : i32
    %c0_i32_0 = arith.constant 0 : i32
    %c0_i32_1 = arith.constant 0 : i32
    return %arg0, %c0_i32, %c0_i32_0 : i32, i32, i32
  }
}

</mosaic_0001>

<llo_original>
// kernel: tpu_custom_call.1
$region0: #{tpu_custom_call.1}
  #allocation0 [shape = 'u32[]', space=smem, size = 0x4, offset = 0x4, fixed_abs, tag = 'smem constant byte address 0x4 - core index']
  #allocation1 [shape = 'u32[144,128]{1,0:T(1,128)}', space=vmem, size = 0x12000, scoped, tag = 'internal scratch']
  %s0 = inlined_call_operand.hbm [shape: f32[8,16,16], index: 0, kind: input, shape index: {}]
  %s1 = inlined_call_operand.vmem [shape: f32[8,23,19], index: 1, kind: output, shape index: {}]
  %s2 = sld [smem:[#allocation0]]
  $region18: #{tpu_custom_call.1} parent=0
    _
  %s4 = ssub.s32 1, %s2
  %s5 = scalar_select 0, %s4, %s2
  $region1: #{tpu_custom_call.1} parent=0
    #allocation2 [shape = 'u8[65536]{0}', space=vmem, size = 0x10000, scoped, tag = 'input window, operand 0, single buffered']
    #allocation3 [shape = 's32[1]{0}', space=sflag, size = 0x4, scoped, tag = 'scoped memory for tpu_custom_call.1']
    %6 = vsyncpa [#allocation3], 0
    // Predicated region
    $region2: #{tpu_custom_call.1} parent=1 // pred_check
      _
    $region3: #{tpu_custom_call.1} parent=1 // pred_check_branch
      %8 = sbr.rel (0) target = $region5
    $region4: #{tpu_custom_call.1} parent=1 // pred_region
      %s10 = ssub.s32 2048, 2048
      %11 = vsyncadd [#allocation3], %s10
      %s12 = sshll.u32 [#allocation2], 4
      %s13 = int_to_ptr.vmem [resolvable:$true] %s12
      %18 = dma.hbm_to_vmem [thread:$0]  %s0, 2048, %s13, [#allocation3], 128, 128, 8
    $region5: #{tpu_custom_call.1} parent=1 // pred_fallthru
      _
    // Predicated region
    $region6: #{tpu_custom_call.1} parent=1 // pred_check
      _
    $region7: #{tpu_custom_call.1} parent=1 // pred_check_branch
      %20 = sbr.rel (0) target = $region9
    $region8: #{tpu_custom_call.1} parent=1 // pred_region
      %21 = dma.done [#allocation3], 2048
    $region9: #{tpu_custom_call.1} parent=1 // pred_fallthru
      _
    %vm22 = vcmask 149504
    %23 = vst.msk [vmem:[%s1] sm:$0x7] %vm22, 0.0
    %24 = vst.msk [vmem:[%s1 + $0x18] sm:$0x7] %vm22, 0.0
    %25 = vst.msk [vmem:[%s1 + $0x30] sm:$0x7] %vm22, 0.0
    %26 = vst.msk [vmem:[%s1 + $0x48] sm:$0x7] %vm22, 0.0
    %27 = vst.msk [vmem:[%s1 + $0x60] sm:$0x7] %vm22, 0.0
    %28 = vst.msk [vmem:[%s1 + $0x78] sm:$0x7] %vm22, 0.0
    %29 = vst.msk [vmem:[%s1 + $0x90] sm:$0x7] %vm22, 0.0
    %30 = vst.msk [vmem:[%s1 + $0xa8] sm:$0x7] %vm22, 0.0
    %vm31 = vcmask 150528
    %32 = vst.msk [vmem:[%s1 + $0x13] sm:$0xf] %vm31, 0.0
    %33 = vst.msk [vmem:[%s1 + $0x2b] sm:$0xf] %vm31, 0.0
    %34 = vst.msk [vmem:[%s1 + $0x43] sm:$0xf] %vm31, 0.0
    %35 = vst.msk [vmem:[%s1 + $0x5b] sm:$0xf] %vm31, 0.0
    %36 = vst.msk [vmem:[%s1 + $0x73] sm:$0xf] %vm31, 0.0
    %37 = vst.msk [vmem:[%s1 + $0x8b] sm:$0xf] %vm31, 0.0
    %38 = vst.msk [vmem:[%s1 + $0xa3] sm:$0xf] %vm31, 0.0
    %39 = vst.msk [vmem:[%s1 + $0xbb] sm:$0xf] %vm31, 0.0
    %v40 = vld [vmem:[#allocation2] sm:$0xff]
    %v41 = vld [vmem:[#allocation2 + $0x8] sm:$0xff]
    %v42 = vld [vmem:[#allocation2 + $0x10] sm:$0xff]
    %v43 = vld [vmem:[#allocation2 + $0x18] sm:$0xff]
    %v44 = vld [vmem:[#allocation2 + $0x20] sm:$0xff]
    %v45 = vld [vmem:[#allocation2 + $0x28] sm:$0xff]
    %v46 = vld [vmem:[#allocation2 + $0x30] sm:$0xff]
    %v47 = vld [vmem:[#allocation2 + $0x38] sm:$0xff]
    %v48 = vld [vmem:[#allocation2 + $0x40] sm:$0xff]
    %v49 = vld [vmem:[#allocation2 + $0x48] sm:$0xff]
    %v50 = vld [vmem:[#allocation2 + $0x50] sm:$0xff]
    %v51 = vld [vmem:[#allocation2 + $0x58] sm:$0xff]
    %v52 = vld [vmem:[#allocation2 + $0x60] sm:$0xff]
    %v53 = vld [vmem:[#allocation2 + $0x68] sm:$0xff]
    %v54 = vld [vmem:[#allocation2 + $0x70] sm:$0xff]
    %v55 = vld [vmem:[#allocation2 + $0x78] sm:$0xff]
    %72 = vrot.lane.b32.xlu0 %v40, 1
    %v73 = vpop.permute.xlu0 %72
    %74 = vrot.lane.b32.xlu0 %v41, 1
    %v75 = vpop.permute.xlu0 %74
    %76 = vrot.lane.b32.xlu0 %v42, 1
    %v77 = vpop.permute.xlu0 %76
    %78 = vrot.lane.b32.xlu0 %v43, 1
    %v79 = vpop.permute.xlu0 %78
    %80 = vrot.lane.b32.xlu0 %v44, 1
    %v81 = vpop.permute.xlu0 %80
    %82 = vrot.lane.b32.xlu0 %v45, 1
    %v83 = vpop.permute.xlu0 %82
    %84 = vrot.lane.b32.xlu0 %v46, 1
    %v85 = vpop.permute.xlu0 %84
    %86 = vrot.lane.b32.xlu0 %v47, 1
    %v87 = vpop.permute.xlu0 %86
    %88 = vrot.lane.b32.xlu0 %v48, 1
    %v89 = vpop.permute.xlu0 %88
    %90 = vrot.lane.b32.xlu0 %v49, 1
    %v91 = vpop.permute.xlu0 %90
    %92 = vrot.lane.b32.xlu0 %v50, 1
    %v93 = vpop.permute.xlu0 %92
    %94 = vrot.lane.b32.xlu0 %v51, 1
    %v95 = vpop.permute.xlu0 %94
    %96 = vrot.lane.b32.xlu0 %v52, 1
    %v97 = vpop.permute.xlu0 %96
    %98 = vrot.lane.b32.xlu0 %v53, 1
    %v99 = vpop.permute.xlu0 %98
    %100 = vrot.lane.b32.xlu0 %v54, 1
    %v101 = vpop.permute.xlu0 %100
    %102 = vrot.lane.b32.xlu0 %v55, 1
    %v103 = vpop.permute.xlu0 %102
    %vm120 = vcmask 7168
    %v121 = vsel %vm120, 0.0, %v73
    %v122 = vsel %vm120, 0.0, %v75
    %v123 = vsel %vm120, 0.0, %v77
    %v124 = vsel %vm120, 0.0, %v79
    %v125 = vsel %vm120, 0.0, %v81
    %v126 = vsel %vm120, 0.0, %v83
    %v127 = vsel %vm120, 0.0, %v85
    %v128 = vsel %vm120, 0.0, %v87
    %v129 = vsel %vm120, 0.0, %v89
    %v130 = vsel %vm120, 0.0, %v91
    %v131 = vsel %vm120, 0.0, %v93
    %v132 = vsel %vm120, 0.0, %v95
    %v133 = vsel %vm120, 0.0, %v97
    %v134 = vsel %vm120, 0.0, %v99
    %v135 = vsel %vm120, 0.0, %v101
    %v136 = vsel %vm120, 0.0, %v103
    %vm137 = vcmask 138240
    %v138 = vsel %vm137, %v121, 0.0
    %v139 = vsel %vm137, %v122, 0.0
    %v140 = vsel %vm137, %v123, 0.0
    %v141 = vsel %vm137, %v124, 0.0
    %v142 = vsel %vm137, %v125, 0.0
    %v143 = vsel %vm137, %v126, 0.0
    %v144 = vsel %vm137, %v127, 0.0
    %v145 = vsel %vm137, %v128, 0.0
    %v146 = vsel %vm137, %v129, 0.0
    %v147 = vsel %vm137, %v130, 0.0
    %v148 = vsel %vm137, %v131, 0.0
    %v149 = vsel %vm137, %v132, 0.0
    %v150 = vsel %vm137, %v133, 0.0
    %v151 = vsel %vm137, %v134, 0.0
    %v152 = vsel %vm137, %v135, 0.0
    %v153 = vsel %vm137, %v136, 0.0
    %vm154 = vcmask 154624
    %155 = vst.msk [vmem:[%s1 + $0x3] sm:$0xff] %vm154, %v138
    %156 = vst.msk [vmem:[%s1 + $0xb] sm:$0xff] %vm154, %v139
    %157 = vst.msk [vmem:[%s1 + $0x1b] sm:$0xff] %vm154, %v140
    %158 = vst.msk [vmem:[%s1 + $0x23] sm:$0xff] %vm154, %v141
    %159 = vst.msk [vmem:[%s1 + $0x33] sm:$0xff] %vm154, %v142
    %160 = vst.msk [vmem:[%s1 + $0x3b] sm:$0xff] %vm154, %v143
    %161 = vst.msk [vmem:[%s1 + $0x4b] sm:$0xff] %vm154, %v144
    %162 = vst.msk [vmem:[%s1 + $0x53] sm:$0xff] %vm154, %v145
    %163 = vst.msk [vmem:[%s1 + $0x63] sm:$0xff] %vm154, %v146
    %164 = vst.msk [vmem:[%s1 + $0x6b] sm:$0xff] %vm154, %v147
    %165 = vst.msk [vmem:[%s1 + $0x7b] sm:$0xff] %vm154, %v148
    %166 = vst.msk [vmem:[%s1 + $0x83] sm:$0xff] %vm154, %v149
    %167 = vst.msk [vmem:[%s1 + $0x93] sm:$0xff] %vm154, %v150
    %168 = vst.msk [vmem:[%s1 + $0x9b] sm:$0xff] %vm154, %v151
    %169 = vst.msk [vmem:[%s1 + $0xab] sm:$0xff] %vm154, %v152
    %170 = vst.msk [vmem:[%s1 + $0xb3] sm:$0xff] %vm154, %v153
    // Predicated region
    $region10: #{tpu_custom_call.1} parent=1 // pred_check
      _
    $region11: #{tpu_custom_call.1} parent=1 // pred_check_branch
      %172 = sbr.rel (0) target = $region13
    $region12: #{tpu_custom_call.1} parent=1 // pred_region
      _
    $region13: #{tpu_custom_call.1} parent=1 // pred_fallthru
      _
    // Predicated region
    $region14: #{tpu_custom_call.1} parent=1 // pred_check
      _
    $region15: #{tpu_custom_call.1} parent=1 // pred_check_branch
      %174 = sbr.rel (0) target = $region17
    $region16: #{tpu_custom_call.1} parent=1 // pred_region
      _
    $region17: #{tpu_custom_call.1} parent=1 // pred_fallthru
      _
    %175 = vsyncpa [#allocation3], 1

</llo_original>
